<compile_context>
chip_gen: v5e
topology: v5e:2x2
jax: 0.10.0
libtpu: 0.0.40
codegen_flags: <defaults>
</compile_context>

<pallas_src>
import jax
import jax.numpy as jnp
from jax.experimental import pallas as pl
from jax.experimental.pallas import tpu as pltpu


# ---------------- Pallas kernels ----------------

def linear_kernel(x_ref, w_ref, b_ref, o_ref):
    # y_pred = x @ W.T + b, expressed as dot_general contracting the last dim of
    # both operands so no transpose is materialized (MXU, f32 accumulate).
    o_ref[...] = (
        jax.lax.dot_general(
            x_ref[...], w_ref[...],
            dimension_numbers=(((1,), (1,)), ((), ())),
            preferred_element_type=jnp.float32,
        )
        + b_ref[...]
    )


def cross_entropy_kernel(x_ref, w_ref, b_ref, y_ref, loss_ref):
    # Fused linear + softmax cross-entropy (mean reduction). b_ref is pre-padded
    # with -1e30 for columns >= C, so padded logits are already masked out of
    # max/exp/sum and can never equal a valid label -- no in-kernel class mask.
    logits = (
        jax.lax.dot_general(
            x_ref[...], w_ref[...],
            dimension_numbers=(((1,), (1,)), ((), ())),
            preferred_element_type=jnp.float32,
        )
        + b_ref[...]
    )                                                                # (B, CP) f32
    B, CP = logits.shape

    # Softmax intermediates stay 2-D (natural sublane x lane layout).
    m = jnp.max(logits, axis=-1, keepdims=True)                      # (B, 1)
    lse = m + jnp.log(jnp.sum(jnp.exp(logits - m), axis=-1, keepdims=True))

    # Vectorized correct-class gather: one compare + select + row-reduce.
    col = jax.lax.broadcasted_iota(jnp.int32, (B, CP), 1)            # (B, CP)
    correct = jnp.sum(
        jnp.where(col == y_ref[...], logits, 0.0),                   # y_ref: (B, 1)
        axis=-1, keepdims=True,
    )                                                                # (B, 1)

    # Single reduction for the scalar epilogue.
    loss_ref[0] = jnp.sum(lse - correct) / jnp.float32(B)


# ---------------- Wrappers ----------------

def prepare_params(W, b):
    """Pad/cast nn.Linear params ONCE (hoisted out of the per-call forward).

    W: (C, D) in nn.Linear layout, b: (C,). Class dim padded to lane-dense 128.
    Two bias variants: zero-padded for the logits path, -1e30-padded for the CE
    path (folds the padded-class mask into the matmul epilogue).
    """
    C, D = W.shape
    CP = ((C + 127) // 128) * 128
    W_pad = jnp.pad(W.astype(jnp.float32), ((0, CP - C), (0, 0)))        # (CP, D)
    b_row = b.astype(jnp.float32).reshape(1, C)
    b_pad_logits = jnp.pad(b_row, ((0, 0), (0, CP - C)))                 # (1, CP)
    b_pad_ce = jnp.pad(b_row, ((0, 0), (0, CP - C)),
                       constant_values=jnp.float32(-1e30))               # (1, CP)
    return {"W_pad": W_pad, "b_pad_logits": b_pad_logits,
            "b_pad_ce": b_pad_ce, "C": C, "CP": CP}


def max_model_forward(params, x, y=None):
    """Forward pass of MaxModel.

    x: (B, D) float32, y: optional (B,) int labels in [0, C).
    Returns logits (B, C) if y is None, else scalar mean cross-entropy loss.
    Note: out-of-range labels (y >= C) contribute 0 instead of erroring.
    """
    x = x.astype(jnp.float32)
    B = x.shape[0]
    C, CP = params["C"], params["CP"]

    vmem = pl.BlockSpec(memory_space=pltpu.MemorySpace.VMEM)
    smem = pl.BlockSpec(memory_space=pltpu.MemorySpace.SMEM)

    if y is None:
        logits_pad = pl.pallas_call(
            linear_kernel,
            out_shape=jax.ShapeDtypeStruct((B, CP), jnp.float32),
            in_specs=[vmem, vmem, vmem],
            out_specs=vmem,
        )(x, params["W_pad"], params["b_pad_logits"])
        return logits_pad[:, :C]

    y_2d = y.astype(jnp.int32).reshape(B, 1)                            # (B, 1) VMEM
    loss = pl.pallas_call(
        cross_entropy_kernel,
        out_shape=jax.ShapeDtypeStruct((1,), jnp.float32),
        in_specs=[vmem, vmem, vmem, vmem],
        out_specs=smem,
    )(x, params["W_pad"], params["b_pad_ce"], y_2d)
    return loss[0]


# ---------------- Main ----------------

if __name__ == "__main__":
    B, D, C = 8, 32, 5  # batch, input_size, num classes (Linear(input_size, 5))

    key = jax.random.PRNGKey(0)
    kx, kw, kb, ky = jax.random.split(key, 4)

    x = jax.random.normal(kx, (B, D), dtype=jnp.float32)
    # Deterministic init mimicking nn.Linear's uniform(-1/sqrt(D), 1/sqrt(D))
    bound = 1.0 / jnp.sqrt(jnp.float32(D))
    W = jax.random.uniform(kw, (C, D), minval=-bound, maxval=bound, dtype=jnp.float32)
    b = jax.random.uniform(kb, (C,), minval=-bound, maxval=bound, dtype=jnp.float32)
    y = jax.random.randint(ky, (B,), 0, C, dtype=jnp.int32)

    # Pad/cast params once (init-time), not per forward call.
    params = prepare_params(W, b)

    # Path 1: y is None -> return logits
    logits = jax.block_until_ready(max_model_forward(params, x))

    # Path 2: y given -> return mean cross-entropy loss
    loss = jax.block_until_ready(max_model_forward(params, x, y))

    # Reference check in plain JAX
    ref_logits = x @ W.T + b
    m = jnp.max(ref_logits, axis=-1, keepdims=True)
    ref_lse = m[:, 0] + jnp.log(jnp.sum(jnp.exp(ref_logits - m), axis=-1))
    ref_loss = jnp.mean(ref_lse - ref_logits[jnp.arange(B), y])

    assert logits.shape == (B, C)
    assert jnp.allclose(logits, ref_logits, atol=1e-5, rtol=1e-5)
    assert jnp.allclose(loss, ref_loss, atol=1e-5, rtol=1e-5)

    print("KERNEL_OK")
</pallas_src>

<mosaic_0001>
module attributes {stable_mosaic.version = 11 : i64} {
  func.func @linear_kernel(%arg0: memref<8x32xf32, #tpu.memory_space<vmem>>, %arg1: memref<128x32xf32, #tpu.memory_space<vmem>>, %arg2: memref<1x128xf32, #tpu.memory_space<vmem>>, %arg3: memref<8x128xf32, #tpu.memory_space<vmem>>) attributes {dimension_semantics = [], scalar_prefetch = 0 : i64, scratch_operands = 0 : i64, tpu.core_type = #tpu.core_type<tc>} {
    %c0 = arith.constant 0 : index
    %c0_0 = arith.constant 0 : index
    %0 = vector.load %arg0[%c0, %c0_0] : memref<8x32xf32, #tpu.memory_space<vmem>>, vector<8x32xf32>
    %c0_1 = arith.constant 0 : index
    %c0_2 = arith.constant 0 : index
    %1 = vector.load %arg1[%c0_1, %c0_2] : memref<128x32xf32, #tpu.memory_space<vmem>>, vector<128x32xf32>
    %cst = arith.constant dense<0.000000e+00> : vector<8x128xf32>
    %2 = tpu.matmul %0, %1, %cst {dimension_numbers = #tpu.dot_dimension_numbers<[1], [1], [0], [0], [0, 0, 1, 0], [], []>} : vector<8x32xf32>, vector<128x32xf32>, vector<8x128xf32> -> vector<8x128xf32>
    %c0_3 = arith.constant 0 : index
    %c0_4 = arith.constant 0 : index
    %3 = vector.load %arg2[%c0_3, %c0_4] : memref<1x128xf32, #tpu.memory_space<vmem>>, vector<1x128xf32>
    %4 = vector.broadcast %3 : vector<1x128xf32> to vector<8x128xf32>
    %5 = arith.addf %2, %4 : vector<8x128xf32>
    %c0_5 = arith.constant 0 : index
    %c0_6 = arith.constant 0 : index
    %6 = vector.load %arg3[%c0_5, %c0_6] : memref<8x128xf32, #tpu.memory_space<vmem>>, vector<8x128xf32>
    tpu.vector_store %arg3[%c0_5, %c0_6], %5 {strides = array<i32>} : memref<8x128xf32, #tpu.memory_space<vmem>>, vector<8x128xf32>,
    return
  }
}

</mosaic_0001>

<llo_original>
// kernel: tpu_custom_call.1
$region0: #{tpu_custom_call.1}
  #allocation0 [shape = 'u32[]', space=smem, size = 0x4, offset = 0x4, fixed_abs, tag = 'smem constant byte address 0x4 - core index']
  #allocation1 [shape = 'u32[72,128]{1,0:T(1,128)}', space=vmem, size = 0x9000, scoped, tag = 'internal scratch']
  %s0 = inlined_call_operand.vmem [shape: f32[8,32], index: 0, kind: input, shape index: {}]
  %s1 = inlined_call_operand.vmem [shape: f32[128,32], index: 1, kind: input, shape index: {}]
  %s2 = inlined_call_operand.vmem [shape: f32[1,128], index: 2, kind: input, shape index: {}]
  %s3 = inlined_call_operand.hbm [shape: f32[8,128], index: 3, kind: output, shape index: {}]
  %s4 = sld [smem:[#allocation0]]
  $region22: #{tpu_custom_call.1} parent=0
    _
  %s6 = ssub.s32 1, %s4
  %s7 = scalar_select 0, %s6, %s4
  $region1: #{tpu_custom_call.1} parent=0
    #allocation2 [shape = 'u8[4096]{0}', space=vmem, size = 0x1000, scoped, tag = 'output window, operand 0, single buffered']
    #allocation3 [shape = 's32[1]{0}', space=sflag, size = 0x4, scoped, tag = 'scoped memory for tpu_custom_call.1']
    %8 = vsyncpa [#allocation3], 0
    // Predicated region
    $region2: #{tpu_custom_call.1} parent=1 // pred_check
      _
    $region3: #{tpu_custom_call.1} parent=1 // pred_check_branch
      %10 = sbr.rel (0) target = $region5
    $region4: #{tpu_custom_call.1} parent=1 // pred_region
      _
    $region5: #{tpu_custom_call.1} parent=1 // pred_fallthru
      _
    // Predicated region
    $region6: #{tpu_custom_call.1} parent=1 // pred_check
      _
    $region7: #{tpu_custom_call.1} parent=1 // pred_check_branch
      %12 = sbr.rel (0) target = $region9
    $region8: #{tpu_custom_call.1} parent=1 // pred_region
      _
    $region9: #{tpu_custom_call.1} parent=1 // pred_fallthru
      _
    // Predicated region
    $region10: #{tpu_custom_call.1} parent=1 // pred_check
      _
    $region11: #{tpu_custom_call.1} parent=1 // pred_check_branch
      %14 = sbr.rel (0) target = $region13
    $region12: #{tpu_custom_call.1} parent=1 // pred_region
      _
    $region13: #{tpu_custom_call.1} parent=1 // pred_fallthru
      _
    %v15 = vld [vmem:[%s0] sm:$0xff]
    %v16 = vld [vmem:[%s1] sm:$0xff]
    %v17 = vld [vmem:[%s1 + $0x8] sm:$0xff]
    %v18 = vld [vmem:[%s1 + $0x10] sm:$0xff]
    %v19 = vld [vmem:[%s1 + $0x18] sm:$0xff]
    %v20 = vld [vmem:[%s1 + $0x20] sm:$0xff]
    %v21 = vld [vmem:[%s1 + $0x28] sm:$0xff]
    %v22 = vld [vmem:[%s1 + $0x30] sm:$0xff]
    %v23 = vld [vmem:[%s1 + $0x38] sm:$0xff]
    %v24 = vld [vmem:[%s1 + $0x40] sm:$0xff]
    %v25 = vld [vmem:[%s1 + $0x48] sm:$0xff]
    %v26 = vld [vmem:[%s1 + $0x50] sm:$0xff]
    %v27 = vld [vmem:[%s1 + $0x58] sm:$0xff]
    %v28 = vld [vmem:[%s1 + $0x60] sm:$0xff]
    %v29 = vld [vmem:[%s1 + $0x68] sm:$0xff]
    %v30 = vld [vmem:[%s1 + $0x70] sm:$0xff]
    %v31 = vld [vmem:[%s1 + $0x78] sm:$0xff]
    %v32 = vld [vmem:[%s2] sm:$0x1]
    %v34 = vperm.slane %v32, 0
    %vm36 = vcmask 261120
    %v38 = vsel %vm36, %v15, 0
    %v41 = vsel %vm36, %v16, 0
    %v44 = vsel %vm36, %v17, 0
    %v47 = vsel %vm36, %v18, 0
    %v50 = vsel %vm36, %v19, 0
    %v53 = vsel %vm36, %v20, 0
    %v56 = vsel %vm36, %v21, 0
    %v59 = vsel %vm36, %v22, 0
    %v62 = vsel %vm36, %v23, 0
    %v65 = vsel %vm36, %v24, 0
    %v68 = vsel %vm36, %v25, 0
    %v71 = vsel %vm36, %v26, 0
    %v74 = vsel %vm36, %v27, 0
    %v77 = vsel %vm36, %v28, 0
    %v80 = vsel %vm36, %v29, 0
    %v83 = vsel %vm36, %v30, 0
    %v86 = vsel %vm36, %v31, 0
    %88 = vmatpush.xpose.msra.mxu0 %v86
    %89 = vmatpush.xpose.msra.mxu0 %v83
    %90 = vmatpush.xpose.msra.mxu0 %v80
    %91 = vmatpush.xpose.msra.mxu0 %v77
    %92 = vmatpush.xpose.msra.mxu0 %v74
    %93 = vmatpush.xpose.msra.mxu0 %v71
    %94 = vmatpush.xpose.msra.mxu0 %v68
    %95 = vmatpush.xpose.msra.mxu0 %v65
    %96 = vmatpush.xpose.msra.mxu0 %v62
    %97 = vmatpush.xpose.msra.mxu0 %v59
    %98 = vmatpush.xpose.msra.mxu0 %v56
    %99 = vmatpush.xpose.msra.mxu0 %v53
    %100 = vmatpush.xpose.msra.mxu0 %v50
    %101 = vmatpush.xpose.msra.mxu0 %v47
    %102 = vmatpush.xpose.msra.mxu0 %v44
    %103 = vmatpush.xpose.msra.mxu0 %v41
    %104 = vmatmul.f32.gmra.mxu0 %v38
    %v105 = vpop.f32.mrf.mxu0
    %v106 = vadd.f32 %v34, %v105
    %107 = vdwg.mxu0
    %108 = vst [vmem:[#allocation2] sm:$0xff] %v106
    // Predicated region
    $region14: #{tpu_custom_call.1} parent=1 // pred_check
      _
    $region15: #{tpu_custom_call.1} parent=1 // pred_check_branch
      %110 = sbr.rel (0) target = $region17
    $region16: #{tpu_custom_call.1} parent=1 // pred_region
      %112 = vsyncadd [#allocation3], 0
      %s114 = sshll.u32 [#allocation2], 4
      %s115 = int_to_ptr.vmem [resolvable:$true] %s114
      %s116 = sshll.u32 %s3, 4
      %s117 = int_to_ptr.hbm [resolvable:$true] %s116
      %119 = dma.vmem_to_hbm [thread:$0]  %s115, 128, %s117, [#allocation3]
    $region17: #{tpu_custom_call.1} parent=1 // pred_fallthru
      _
    // Predicated region
    $region18: #{tpu_custom_call.1} parent=1 // pred_check
      _
    $region19: #{tpu_custom_call.1} parent=1 // pred_check_branch
      %121 = sbr.rel (0) target = $region21
    $region20: #{tpu_custom_call.1} parent=1 // pred_region
      %123 = dma.done [#allocation3], 128
    $region21: #{tpu_custom_call.1} parent=1 // pred_fallthru
      _
    %124 = vsyncpa [#allocation3], 1

</llo_original>
